<compile_context>
chip_gen: v5e
topology: v5e:2x2
jax: 0.10.0
libtpu: 0.0.40
codegen_flags: <defaults>
</compile_context>

<pallas_src>
import numpy as np
import jax
import jax.numpy as jnp
from jax.experimental import pallas as pl
from jax.experimental.pallas import tpu as pltpu

D_IN, H1, H2, D_OUT = 2, 50, 100, 2
LANE = 128                       # TPU lane width: all feature dims padded to 128
W1_ROW, W2_ROW, W3_ROW, B_ROW = 0, 128, 256, 384
P_ROWS = 392                     # 3*128 weight rows + 8 (sublane-padded) bias rows
TILE_B_MAX = 512                 # batch tile: big enough to feed the MXU, tiny in VMEM


def odefunc_kernel(y_ref, p_ref, o_ref):
    """One batch tile of Linear(2,50) -> Linear(50,100) -> Linear(100,2)."""
    y = y_ref[...]                                    # (TILE_B, 128); lanes >= 2 are zero
    # Static, tile-aligned views into the single packed parameter buffer.
    w1 = p_ref[W1_ROW:W1_ROW + LANE, :]
    w2 = p_ref[W2_ROW:W2_ROW + LANE, :]
    w3 = p_ref[W3_ROW:W3_ROW + LANE, :]
    b1 = p_ref[B_ROW + 0:B_ROW + 1, :]
    b2 = p_ref[B_ROW + 1:B_ROW + 2, :]
    b3 = p_ref[B_ROW + 2:B_ROW + 3, :]
    # Three lane-dense 128x128 MXU matmuls with f32 accumulation; zero padding of
    # y / weight rows / weight+bias lanes keeps every padded lane exactly zero.
    h1 = jnp.dot(y,  w1, preferred_element_type=jnp.float32) + b1
    h2 = jnp.dot(h1, w2, preferred_element_type=jnp.float32) + b2
    h3 = jnp.dot(h2, w3, preferred_element_type=jnp.float32) + b3
    o_ref[...] = h3.astype(o_ref.dtype)               # (TILE_B, 128); lanes >= 2 stay zero


def init_params(key, dtype=jnp.float32):
    """nn.Linear default init: U(-1/sqrt(fan_in), 1/sqrt(fan_in)).
    Weights returned already transposed to (in, out); biases as (1, out)."""
    dims = [(D_IN, H1), (H1, H2), (H2, D_OUT)]
    params = []
    for i, (din, dout) in enumerate(dims):
        kw, kb = jax.random.split(jax.random.fold_in(key, i))
        bound = 1.0 / float(np.sqrt(din))
        w = jax.random.uniform(kw, (din, dout), dtype, -bound, bound)
        b = jax.random.uniform(kb, (1, dout), dtype, -bound, bound)
        params += [w, b]
    return tuple(params)


def pack_params(params, dtype=jnp.float32):
    """Pack (w1,b1,w2,b2,w3,b3) into ONE zero-padded (392, 128) buffer, offline.
    Rows beyond fan-in / lanes beyond fan-out stay zero -> padded matmuls exact."""
    w1, b1, w2, b2, w3, b3 = params
    buf = np.zeros((P_ROWS, LANE), dtype=np.float32)
    buf[W1_ROW:W1_ROW + D_IN, :H1] = np.asarray(w1)
    buf[W2_ROW:W2_ROW + H1, :H2] = np.asarray(w2)
    buf[W3_ROW:W3_ROW + H2, :D_OUT] = np.asarray(w3)
    buf[B_ROW + 0, :H1] = np.asarray(b1).reshape(-1)
    buf[B_ROW + 1, :H2] = np.asarray(b2).reshape(-1)
    buf[B_ROW + 2, :D_OUT] = np.asarray(b3).reshape(-1)
    # NOTE: once a real workload is BW/MXU-bound (large batch / fused time loop),
    # packing weights as bfloat16 (keeping preferred_element_type=f32) halves the
    # weight DMA on v6e/v7x; kept f32 here so results match the f32 reference.
    return jnp.asarray(buf, dtype)


def _round_up(x, m):
    return ((x + m - 1) // m) * m


def odefunc_forward_padded(y_pad, packed_params, tile_b):
    """Hot path: state stays in the padded (Bp, 128) lane layout across calls
    (no per-call slice/relayout).  Bp must be a multiple of tile_b."""
    Bp = y_pad.shape[0]
    assert Bp % tile_b == 0
    flops = 2 * Bp * (D_IN * H1 + H1 * H2 + H2 * D_OUT)
    bytes_accessed = int(2 * y_pad.size * y_pad.dtype.itemsize
                         + packed_params.size * packed_params.dtype.itemsize)
    # TODO(synk): the ODE-solver time loop lives outside this module's forward();
    # fusing it (grid=(n_steps, n_batch_tiles), weights VMEM-resident, state carried
    # via input_output_aliases / scratch) belongs in the integrator wrapper.  Since
    # the net has no nonlinearities it could also be precomposed offline into a
    # single 2x2 affine map; kept layered to mirror nn.Sequential's parameters.
    return pl.pallas_call(
        odefunc_kernel,
        out_shape=jax.ShapeDtypeStruct((Bp, LANE), y_pad.dtype),
        grid=(Bp // tile_b,),
        in_specs=[
            pl.BlockSpec((tile_b, LANE), lambda i: (i, 0)),   # batch tile of the state
            pl.BlockSpec((P_ROWS, LANE), lambda i: (0, 0)),   # packed params, VMEM-resident
        ],
        out_specs=pl.BlockSpec((tile_b, LANE), lambda i: (i, 0)),
        compiler_params=pltpu.CompilerParams(
            dimension_semantics=("parallel",)),               # v7x: batch tiles split over 2 TCs
        cost_estimate=pl.CostEstimate(flops=flops, transcendentals=0,
                                      bytes_accessed=bytes_accessed),
    )(y_pad, packed_params)


def odefunc_forward(t, y, packed_params, tile_b_max=TILE_B_MAX):
    """Mirrors ODEFunc.forward(t, y): pads y to the (Bp, 128) lane layout, runs the
    fused kernel, slices back to (B, 2)."""
    # Matches the PyTorch forward's print(t, y.shape).  Under jit this fires only
    # at trace time (and prints a tracer for t), unlike PyTorch's per-call print.
    print(t, y.shape)
    B = y.shape[0]
    tile_b = min(tile_b_max, _round_up(B, 8))
    Bp = _round_up(B, tile_b)
    y_pad = jnp.zeros((Bp, LANE), y.dtype).at[:B, :D_IN].set(y)
    out_pad = odefunc_forward_padded(y_pad, packed_params, tile_b)
    return out_pad[:B, :D_OUT]


if __name__ == "__main__":
    key = jax.random.PRNGKey(0)
    params = init_params(key)
    packed = pack_params(params)

    # Example inputs: batch of 8 ODE states in R^2, scalar time t.
    y = jax.random.normal(jax.random.fold_in(key, 100), (8, D_IN), jnp.float32)
    t = jnp.float32(0.5)

    out = odefunc_forward(t, y, packed)
    out = jax.block_until_ready(out)

    # Correctness check against plain-JAX reference on the UNPACKED params.
    w1, b1, w2, b2, w3, b3 = params
    ref = ((y @ w1 + b1) @ w2 + b2) @ w3 + b3
    assert out.shape == (8, D_OUT)
    assert jnp.allclose(out, ref, atol=1e-5, rtol=1e-5), float(jnp.max(jnp.abs(out - ref)))

    print("KERNEL_OK")
</pallas_src>

<mosaic_0001>
module attributes {stable_mosaic.version = 11 : i64} {
  func.func @odefunc_kernel(%arg0: i32, %arg1: memref<8x128xf32, #tpu.memory_space<vmem>>, %arg2: memref<392x128xf32, #tpu.memory_space<vmem>>, %arg3: memref<8x128xf32, #tpu.memory_space<vmem>>) attributes {dimension_semantics = [#tpu.dimension_semantics<parallel>], iteration_bounds = array<i64: 1>, scalar_prefetch = 0 : i64, scratch_operands = 0 : i64, tpu.core_type = #tpu.core_type<tc>, window_params = [{transform_indices = @transform_0, window_bounds = array<i64: 8, 128>}, {pipeline_mode = #tpu.pipeline_mode<synchronous>, transform_indices = @transform_1, window_bounds = array<i64: 392, 128>}, {transform_indices = @transform_2, window_bounds = array<i64: 8, 128>}]} {
    %c0 = arith.constant 0 : index
    %c0_0 = arith.constant 0 : index
    %0 = vector.load %arg1[%c0, %c0_0] : memref<8x128xf32, #tpu.memory_space<vmem>>, vector<8x128xf32>
    %c0_1 = arith.constant 0 : index
    %c0_2 = arith.constant 0 : index
    %1 = vector.load %arg2[%c0_1, %c0_2] : memref<392x128xf32, #tpu.memory_space<vmem>>, vector<128x128xf32>
    %c128 = arith.constant 128 : index
    %c0_3 = arith.constant 0 : index
    %2 = vector.load %arg2[%c128, %c0_3] : memref<392x128xf32, #tpu.memory_space<vmem>>, vector<128x128xf32>
    %c256 = arith.constant 256 : index
    %c0_4 = arith.constant 0 : index
    %3 = vector.load %arg2[%c256, %c0_4] : memref<392x128xf32, #tpu.memory_space<vmem>>, vector<128x128xf32>
    %c384 = arith.constant 384 : index
    %c0_5 = arith.constant 0 : index
    %4 = vector.load %arg2[%c384, %c0_5] : memref<392x128xf32, #tpu.memory_space<vmem>>, vector<1x128xf32>
    %c385 = arith.constant 385 : index
    %c0_6 = arith.constant 0 : index
    %5 = vector.load %arg2[%c385, %c0_6] : memref<392x128xf32, #tpu.memory_space<vmem>>, vector<1x128xf32>
    %c386 = arith.constant 386 : index
    %c0_7 = arith.constant 0 : index
    %6 = vector.load %arg2[%c386, %c0_7] : memref<392x128xf32, #tpu.memory_space<vmem>>, vector<1x128xf32>
    %cst = arith.constant dense<0.000000e+00> : vector<8x128xf32>
    %7 = tpu.matmul %0, %1, %cst {dimension_numbers = #tpu.dot_dimension_numbers<[1], [0], [0], [1], [0, 0, 1, 1], [], []>} : vector<8x128xf32>, vector<128x128xf32>, vector<8x128xf32> -> vector<8x128xf32>
    %8 = vector.broadcast %4 : vector<1x128xf32> to vector<8x128xf32>
    %9 = arith.addf %7, %8 : vector<8x128xf32>
    %cst_8 = arith.constant dense<0.000000e+00> : vector<8x128xf32>
    %10 = tpu.matmul %9, %2, %cst_8 {dimension_numbers = #tpu.dot_dimension_numbers<[1], [0], [0], [1], [0, 0, 1, 1], [], []>} : vector<8x128xf32>, vector<128x128xf32>, vector<8x128xf32> -> vector<8x128xf32>
    %11 = vector.broadcast %5 : vector<1x128xf32> to vector<8x128xf32>
    %12 = arith.addf %10, %11 : vector<8x128xf32>
    %cst_9 = arith.constant dense<0.000000e+00> : vector<8x128xf32>
    %13 = tpu.matmul %12, %3, %cst_9 {dimension_numbers = #tpu.dot_dimension_numbers<[1], [0], [0], [1], [0, 0, 1, 1], [], []>} : vector<8x128xf32>, vector<128x128xf32>, vector<8x128xf32> -> vector<8x128xf32>
    %14 = vector.broadcast %6 : vector<1x128xf32> to vector<8x128xf32>
    %15 = arith.addf %13, %14 : vector<8x128xf32>
    %c0_10 = arith.constant 0 : index
    %c0_11 = arith.constant 0 : index
    %16 = vector.load %arg3[%c0_10, %c0_11] : memref<8x128xf32, #tpu.memory_space<vmem>>, vector<8x128xf32>
    tpu.vector_store %arg3[%c0_10, %c0_11], %15 {strides = array<i32>} : memref<8x128xf32, #tpu.memory_space<vmem>>, vector<8x128xf32>,
    return
  }
  func.func @transform_0(%arg0: i32) -> (i32, i32) {
    %c0_i32 = arith.constant 0 : i32
    %c0_i32_0 = arith.constant 0 : i32
    return %arg0, %c0_i32 : i32, i32
  }
  func.func @transform_1(%arg0: i32) -> (i32, i32) {
    %c0_i32 = arith.constant 0 : i32
    %c0_i32_0 = arith.constant 0 : i32
    %c0_i32_1 = arith.constant 0 : i32
    return %c0_i32, %c0_i32_0 : i32, i32
  }
  func.func @transform_2(%arg0: i32) -> (i32, i32) {
    %c0_i32 = arith.constant 0 : i32
    %c0_i32_0 = arith.constant 0 : i32
    return %arg0, %c0_i32 : i32, i32
  }
}

</mosaic_0001>

<llo_original>
// kernel: tpu_custom_call.1
$region0: #{tpu_custom_call.1}
  #allocation0 [shape = 'u32[]', space=smem, size = 0x4, offset = 0x4, fixed_abs, tag = 'smem constant byte address 0x4 - core index']
  #allocation1 [shape = 'u32[72,128]{1,0:T(1,128)}', space=vmem, size = 0x9000, scoped, tag = 'internal scratch']
  %s0 = inlined_call_operand.hbm [shape: f32[8,128], index: 0, kind: input, shape index: {}]
  %s1 = inlined_call_operand.hbm [shape: f32[392,128], index: 1, kind: input, shape index: {}]
  %s2 = inlined_call_operand.hbm [shape: f32[8,128], index: 2, kind: output, shape index: {}]
  %s3 = sld [smem:[#allocation0]]
  $region26: #{tpu_custom_call.1} parent=0
    _
  %s5 = ssub.s32 1, %s3
  %s6 = scalar_select 0, %s5, %s3
  $region1: #{tpu_custom_call.1} parent=0
    #allocation2 [shape = 'u8[4096]{0}', space=vmem, size = 0x1000, scoped, tag = 'input window, operand 0, single buffered']
    #allocation3 [shape = 's32[1]{0}', space=sflag, size = 0x4, scoped, tag = 'scoped memory for tpu_custom_call.1']
    #allocation4 [shape = 's32[1]{0}', space=sflag, size = 0x4, scoped, tag = 'scoped memory for tpu_custom_call.1']
    #allocation5 [shape = 'u8[200704]{0}', space=vmem, size = 0x31000, scoped, tag = 'input window, operand 1, single buffered']
    #allocation6 [shape = 's32[1]{0}', space=sflag, size = 0x4, scoped, tag = 'scoped memory for tpu_custom_call.1']
    #allocation7 [shape = 'u8[4096]{0}', space=vmem, size = 0x1000, scoped, tag = 'output window, operand 0, single buffered']
    %7 = vsyncpa [#allocation3], 0
    %8 = vsyncpa [#allocation6], 0
    %9 = vsyncpa [#allocation4], 0
    // Predicated region
    $region2: #{tpu_custom_call.1} parent=1 // pred_check
      _
    $region3: #{tpu_custom_call.1} parent=1 // pred_check_branch
      %11 = sbr.rel (0) target = $region5
    $region4: #{tpu_custom_call.1} parent=1 // pred_region
      %13 = vsyncadd [#allocation3], 0
      %s15 = sshll.u32 %s0, 4
      %s16 = int_to_ptr.hbm [resolvable:$true] %s15
      %s17 = sshll.u32 [#allocation2], 4
      %s18 = int_to_ptr.vmem [resolvable:$true] %s17
      %20 = dma.hbm_to_vmem [thread:$0]  %s16, 128, %s18, [#allocation3]
    $region5: #{tpu_custom_call.1} parent=1 // pred_fallthru
      _
    // Predicated region
    $region6: #{tpu_custom_call.1} parent=1 // pred_check
      _
    $region7: #{tpu_custom_call.1} parent=1 // pred_check_branch
      %22 = sbr.rel (0) target = $region9
    $region8: #{tpu_custom_call.1} parent=1 // pred_region
      %24 = vsyncadd [#allocation6], 0
      %s25 = sshll.u32 %s1, 4
      %s26 = int_to_ptr.hbm [resolvable:$true] %s25
      %s27 = sshll.u32 [#allocation5], 4
      %s28 = int_to_ptr.vmem [resolvable:$true] %s27
      %33 = dma.hbm_to_vmem [thread:$0]  %s26, 6272, %s28, [#allocation6], 128, 128, 8
    $region9: #{tpu_custom_call.1} parent=1 // pred_fallthru
      _
    // Predicated region
    $region10: #{tpu_custom_call.1} parent=1 // pred_check
      _
    $region11: #{tpu_custom_call.1} parent=1 // pred_check_branch
      %35 = sbr.rel (0) target = $region13
    $region12: #{tpu_custom_call.1} parent=1 // pred_region
      %37 = dma.done [#allocation3], 128
    $region13: #{tpu_custom_call.1} parent=1 // pred_fallthru
      _
    // Predicated region
    $region14: #{tpu_custom_call.1} parent=1 // pred_check
      _
    $region15: #{tpu_custom_call.1} parent=1 // pred_check_branch
      %39 = sbr.rel (0) target = $region17
    $region16: #{tpu_custom_call.1} parent=1 // pred_region
      %41 = dma.done [#allocation6], 6272
    $region17: #{tpu_custom_call.1} parent=1 // pred_fallthru
      _
    %v42 = vld [vmem:[#allocation2] sm:$0xff]
    %v43 = vld [vmem:[#allocation5] sm:$0xff]
    %v44 = vld [vmem:[#allocation5 + $0x8] sm:$0xff]
    %v45 = vld [vmem:[#allocation5 + $0x10] sm:$0xff]
    %v46 = vld [vmem:[#allocation5 + $0x18] sm:$0xff]
    %v47 = vld [vmem:[#allocation5 + $0x20] sm:$0xff]
    %v48 = vld [vmem:[#allocation5 + $0x28] sm:$0xff]
    %v49 = vld [vmem:[#allocation5 + $0x30] sm:$0xff]
    %v50 = vld [vmem:[#allocation5 + $0x38] sm:$0xff]
    %v51 = vld [vmem:[#allocation5 + $0x40] sm:$0xff]
    %v52 = vld [vmem:[#allocation5 + $0x48] sm:$0xff]
    %v53 = vld [vmem:[#allocation5 + $0x50] sm:$0xff]
    %v54 = vld [vmem:[#allocation5 + $0x58] sm:$0xff]
    %v55 = vld [vmem:[#allocation5 + $0x60] sm:$0xff]
    %v56 = vld [vmem:[#allocation5 + $0x68] sm:$0xff]
    %v57 = vld [vmem:[#allocation5 + $0x70] sm:$0xff]
    %v58 = vld [vmem:[#allocation5 + $0x78] sm:$0xff]
    %v59 = vld [vmem:[#allocation5 + $0x80] sm:$0xff]
    %v60 = vld [vmem:[#allocation5 + $0x88] sm:$0xff]
    %v61 = vld [vmem:[#allocation5 + $0x90] sm:$0xff]
    %v62 = vld [vmem:[#allocation5 + $0x98] sm:$0xff]
    %v63 = vld [vmem:[#allocation5 + $0xa0] sm:$0xff]
    %v64 = vld [vmem:[#allocation5 + $0xa8] sm:$0xff]
    %v65 = vld [vmem:[#allocation5 + $0xb0] sm:$0xff]
    %v66 = vld [vmem:[#allocation5 + $0xb8] sm:$0xff]
    %v67 = vld [vmem:[#allocation5 + $0xc0] sm:$0xff]
    %v68 = vld [vmem:[#allocation5 + $0xc8] sm:$0xff]
    %v69 = vld [vmem:[#allocation5 + $0xd0] sm:$0xff]
    %v70 = vld [vmem:[#allocation5 + $0xd8] sm:$0xff]
    %v71 = vld [vmem:[#allocation5 + $0xe0] sm:$0xff]
    %v72 = vld [vmem:[#allocation5 + $0xe8] sm:$0xff]
    %v73 = vld [vmem:[#allocation5 + $0xf0] sm:$0xff]
    %v74 = vld [vmem:[#allocation5 + $0xf8] sm:$0xff]
    %v75 = vld [vmem:[#allocation5 + $0x100] sm:$0xff]
    %v76 = vld [vmem:[#allocation5 + $0x108] sm:$0xff]
    %v77 = vld [vmem:[#allocation5 + $0x110] sm:$0xff]
    %v78 = vld [vmem:[#allocation5 + $0x118] sm:$0xff]
    %v79 = vld [vmem:[#allocation5 + $0x120] sm:$0xff]
    %v80 = vld [vmem:[#allocation5 + $0x128] sm:$0xff]
    %v81 = vld [vmem:[#allocation5 + $0x130] sm:$0xff]
    %v82 = vld [vmem:[#allocation5 + $0x138] sm:$0xff]
    %v83 = vld [vmem:[#allocation5 + $0x140] sm:$0xff]
    %v84 = vld [vmem:[#allocation5 + $0x148] sm:$0xff]
    %v85 = vld [vmem:[#allocation5 + $0x150] sm:$0xff]
    %v86 = vld [vmem:[#allocation5 + $0x158] sm:$0xff]
    %v87 = vld [vmem:[#allocation5 + $0x160] sm:$0xff]
    %v88 = vld [vmem:[#allocation5 + $0x168] sm:$0xff]
    %v89 = vld [vmem:[#allocation5 + $0x170] sm:$0xff]
    %v90 = vld [vmem:[#allocation5 + $0x178] sm:$0xff]
    %v91 = vld [vmem:[#allocation5 + $0x180] sm:$0x1]
    %v92 = vld [vmem:[#allocation5 + $0x181] sm:$0x1]
    %v93 = vld [vmem:[#allocation5 + $0x182] sm:$0x1]
    %v94 = vperm.slane %v91, 0
    %95 = vmatpush.msra.mxu0 %v58
    %96 = vmatpush.msra.mxu0 %v57
    %97 = vmatpush.msra.mxu0 %v56
    %98 = vmatpush.msra.mxu0 %v55
    %99 = vmatpush.msra.mxu0 %v54
    %100 = vmatpush.msra.mxu0 %v53
    %101 = vmatpush.msra.mxu0 %v52
    %102 = vmatpush.msra.mxu0 %v51
    %103 = vmatpush.msra.mxu0 %v50
    %104 = vmatpush.msra.mxu0 %v49
    %105 = vmatpush.msra.mxu0 %v48
    %106 = vmatpush.msra.mxu0 %v47
    %107 = vmatpush.msra.mxu0 %v46
    %108 = vmatpush.msra.mxu0 %v45
    %109 = vmatpush.msra.mxu0 %v44
    %110 = vmatpush.msra.mxu0 %v43
    %111 = vmatmul.f32.gmra.mxu0 %v42
    %v112 = vpop.f32.mrf.mxu0
    %v113 = vadd.f32 %v94, %v112
    %114 = vdwg.mxu0
    %v115 = vperm.slane %v92, 0
    %116 = vmatpush.msra.mxu0 %v74
    %117 = vmatpush.msra.mxu0 %v73
    %118 = vmatpush.msra.mxu0 %v72
    %119 = vmatpush.msra.mxu0 %v71
    %120 = vmatpush.msra.mxu0 %v70
    %121 = vmatpush.msra.mxu0 %v69
    %122 = vmatpush.msra.mxu0 %v68
    %123 = vmatpush.msra.mxu0 %v67
    %124 = vmatpush.msra.mxu0 %v66
    %125 = vmatpush.msra.mxu0 %v65
    %126 = vmatpush.msra.mxu0 %v64
    %127 = vmatpush.msra.mxu0 %v63
    %128 = vmatpush.msra.mxu0 %v62
    %129 = vmatpush.msra.mxu0 %v61
    %130 = vmatpush.msra.mxu0 %v60
    %131 = vmatpush.msra.mxu0 %v59
    %132 = vmatmul.f32.gmra.mxu0 %v113
    %v133 = vpop.f32.mrf.mxu0
    %v134 = vadd.f32 %v115, %v133
    %135 = vdwg.mxu0
    %v136 = vperm.slane %v93, 0
    %137 = vmatpush.msra.mxu0 %v90
    %138 = vmatpush.msra.mxu0 %v89
    %139 = vmatpush.msra.mxu0 %v88
    %140 = vmatpush.msra.mxu0 %v87
    %141 = vmatpush.msra.mxu0 %v86
    %142 = vmatpush.msra.mxu0 %v85
    %143 = vmatpush.msra.mxu0 %v84
    %144 = vmatpush.msra.mxu0 %v83
    %145 = vmatpush.msra.mxu0 %v82
    %146 = vmatpush.msra.mxu0 %v81
    %147 = vmatpush.msra.mxu0 %v80
    %148 = vmatpush.msra.mxu0 %v79
    %149 = vmatpush.msra.mxu0 %v78
    %150 = vmatpush.msra.mxu0 %v77
    %151 = vmatpush.msra.mxu0 %v76
    %152 = vmatpush.msra.mxu0 %v75
    %153 = vmatmul.f32.gmra.mxu0 %v134
    %v154 = vpop.f32.mrf.mxu0
    %v155 = vadd.f32 %v136, %v154
    %156 = vdwg.mxu0
    %157 = vst [vmem:[#allocation7] sm:$0xff] %v155
    // Predicated region
    $region18: #{tpu_custom_call.1} parent=1 // pred_check
      _
    $region19: #{tpu_custom_call.1} parent=1 // pred_check_branch
      %159 = sbr.rel (0) target = $region21
    $region20: #{tpu_custom_call.1} parent=1 // pred_region
      %161 = vsyncadd [#allocation4], 0
      %s163 = sshll.u32 [#allocation7], 4
      %s164 = int_to_ptr.vmem [resolvable:$true] %s163
      %s165 = sshll.u32 %s2, 4
      %s166 = int_to_ptr.hbm [resolvable:$true] %s165
      %168 = dma.vmem_to_hbm [thread:$0]  %s164, 128, %s166, [#allocation4]
    $region21: #{tpu_custom_call.1} parent=1 // pred_fallthru
      _
    // Predicated region
    $region22: #{tpu_custom_call.1} parent=1 // pred_check
      _
    $region23: #{tpu_custom_call.1} parent=1 // pred_check_branch
      %170 = sbr.rel (0) target = $region25
    $region24: #{tpu_custom_call.1} parent=1 // pred_region
      %172 = dma.done [#allocation4], 128
    $region25: #{tpu_custom_call.1} parent=1 // pred_fallthru
      _
    %173 = vsyncpa [#allocation3], 1
    %174 = vsyncpa [#allocation6], 1
    %175 = vsyncpa [#allocation4], 1

</llo_original>
